<compile_context>
chip_gen: v7x
topology: tpu7x:2x2x1
jax: 0.10.0
libtpu: 0.0.40
codegen_flags: <defaults>
</compile_context>

<pallas_src>
import jax
import jax.numpy as jnp
from jax.experimental import pallas as pl
from jax.experimental.pallas import tpu as pltpu


def _round_up(n, m):
    return ((n + m - 1) // m) * m


def nn11_kernel(x_ref,
                w_in_ref, b_in_ref,
                w_h1_ref, b_h1_ref,
                w_h2_ref, b_h2_ref,
                w_out_ref, b_out_ref,
                o_ref):
    # BatchNorm already folded into (w_in, b_in) on the host.
    # dropout(p=0.01) / dropout(p=0.005) -> identity in eval mode.
    x = x_ref[...].astype(jnp.bfloat16)

    # layer_In + ReLU
    h = jnp.dot(x, w_in_ref[...], preferred_element_type=jnp.float32) + b_in_ref[...]
    h = jnp.maximum(h, 0.0).astype(jnp.bfloat16)

    # layer_h1 + ReLU  (out dim zero-padded 17 -> 32; padded cols stay exactly 0)
    h = jnp.dot(h, w_h1_ref[...], preferred_element_type=jnp.float32) + b_h1_ref[...]
    h = jnp.maximum(h, 0.0).astype(jnp.bfloat16)

    # layer_h2 + ReLU  (out dim zero-padded 10 -> 16)
    h = jnp.dot(h, w_h2_ref[...], preferred_element_type=jnp.float32) + b_h2_ref[...]
    h = jnp.maximum(h, 0.0).astype(jnp.bfloat16)

    # layer_Out (no activation)
    logits = jnp.dot(h, w_out_ref[...], preferred_element_type=jnp.float32) + b_out_ref[...]

    # softmax over dim=1 (2 classes), max-stabilized; approx reciprocal -> EUP slot
    m = jnp.max(logits, axis=1, keepdims=True)
    e = jnp.exp(logits - m)
    o_ref[...] = e * pl.reciprocal(jnp.sum(e, axis=1, keepdims=True), approx=True)


def nn_1_1_forward(x, kparams, *, block_b=1024):
    """x: (B, F) float32.  kparams: output of prepare_kernel_params()."""
    B, F = x.shape
    # Batch tile: large for throughput, multiple of 16 (bf16 sublane packing).
    TB = min(_round_up(block_b, 16), _round_up(B, 16))
    Bp = _round_up(B, TB)
    if Bp != B:
        x = jnp.pad(x, ((0, Bp - B), (0, 0)))

    weights = (
        kparams["w_in"], kparams["b_in"],
        kparams["w_h1"], kparams["b_h1"],
        kparams["w_h2"], kparams["b_h2"],
        kparams["w_out"], kparams["b_out"],
    )

    grid = (Bp // TB,)
    const2 = lambda i: (0, 0)  # weights/biases: same block every step -> VMEM-resident
    weight_specs = [pl.BlockSpec(w.shape, const2) for w in weights]

    out = pl.pallas_call(
        nn11_kernel,
        out_shape=jax.ShapeDtypeStruct((Bp, 2), jnp.float32),
        grid=grid,
        in_specs=[pl.BlockSpec((TB, F), lambda i: (i, 0))] + weight_specs,
        out_specs=pl.BlockSpec((TB, 2), lambda i: (i, 0)),
        compiler_params=pltpu.CompilerParams(
            dimension_semantics=("parallel",)),  # shard batch axis across TCs (v7x)
    )(x, *weights)

    return out[:B] if Bp != B else out


def init_raw_params(key, features):
    """PyTorch-like init. Linear weights stored pre-transposed as (in, out)."""
    h1 = round(features / 2) + 1        # layer_h1 out
    h2_in = round(features / 2 + 1)     # layer_h2 in (== h1 for even features)
    assert h1 == h2_in, "pick an even `features` so the module's own dims are consistent"

    def linear(key, fan_in, fan_out):
        kw, kb = jax.random.split(key)
        bound = 1.0 / float(fan_in) ** 0.5
        w = jax.random.uniform(kw, (fan_in, fan_out), jnp.float32, -bound, bound)
        b = jax.random.uniform(kb, (1, fan_out), jnp.float32, -bound, bound)
        return w, b

    k0, k1, k2, k3 = jax.random.split(key, 4)
    w_in, b_in = linear(k0, features, features)
    w_h1, b_h1 = linear(k1, features, h1)
    w_h2, b_h2 = linear(k2, h2_in, 10)
    w_out, b_out = linear(k3, 10, 2)

    return {
        # BatchNorm1d defaults: gamma=1, beta=0, running_mean=0, running_var=1
        "bn_gamma": jnp.ones((features,), jnp.float32),
        "bn_beta": jnp.zeros((features,), jnp.float32),
        "bn_mean": jnp.zeros((features,), jnp.float32),
        "bn_var": jnp.ones((features,), jnp.float32),
        "w_in": w_in, "b_in": b_in,
        "w_h1": w_h1, "b_h1": b_h1,
        "w_h2": w_h2, "b_h2": b_h2,
        "w_out": w_out, "b_out": b_out,
    }


def prepare_kernel_params(raw, eps=1e-5, weight_dtype=jnp.bfloat16):
    """One-time host prep: fold eval-mode BN into layer_In, zero-pad odd inner
    dims to multiples of 16, cast weights to bf16 (biases stay f32)."""
    s = raw["bn_gamma"] * jax.lax.rsqrt(raw["bn_var"] + eps)   # gamma / sqrt(var+eps)
    t = raw["bn_beta"] - raw["bn_mean"] * s                    # BN additive term
    w_in = raw["w_in"] * s[:, None]
    b_in = raw["b_in"] + t[None, :] @ raw["w_in"]

    def pad_to(a, rows, cols):
        return jnp.pad(a, ((0, rows - a.shape[0]), (0, cols - a.shape[1])))

    F = raw["w_in"].shape[0]
    h1p = _round_up(raw["w_h1"].shape[1], 16)   # 17 -> 32
    h2p = _round_up(raw["w_h2"].shape[1], 16)   # 10 -> 16

    w_h1 = pad_to(raw["w_h1"], F, h1p)
    b_h1 = pad_to(raw["b_h1"], 1, h1p)
    w_h2 = pad_to(raw["w_h2"], h1p, h2p)
    b_h2 = pad_to(raw["b_h2"], 1, h2p)
    w_out = pad_to(raw["w_out"], h2p, 2)
    b_out = raw["b_out"]

    wd = weight_dtype
    f32 = jnp.float32
    return {
        "w_in": w_in.astype(wd),  "b_in": b_in.astype(f32),
        "w_h1": w_h1.astype(wd),  "b_h1": b_h1.astype(f32),
        "w_h2": w_h2.astype(wd),  "b_h2": b_h2.astype(f32),
        "w_out": w_out.astype(wd), "b_out": b_out.astype(f32),
    }


if __name__ == "__main__":
    features = 32
    batch = 8

    key = jax.random.PRNGKey(0)
    kx, kp = jax.random.split(key)
    x = jax.random.normal(kx, (batch, features), jnp.float32)

    raw = init_raw_params(kp, features)
    kparams = prepare_kernel_params(raw)

    out = nn_1_1_forward(x, kparams)
    out = jax.block_until_ready(out)

    # sanity: softmax rows sum to ~1 (approx reciprocal + bf16 weights -> loose tol)
    assert out.shape == (batch, 2)
    assert bool(jnp.all(jnp.isfinite(out)))
    assert bool(jnp.all(jnp.abs(jnp.sum(out, axis=1) - 1.0) < 1e-2))
    print("KERNEL_OK")
</pallas_src>

<mosaic_0001>
module attributes {stable_mosaic.version = 11 : i64} {
  func.func @nn11_kernel(%arg0: i32, %arg1: memref<16x32xf32, #tpu.memory_space<vmem>>, %arg2: memref<32x32xbf16, #tpu.memory_space<vmem>>, %arg3: memref<1x32xf32, #tpu.memory_space<vmem>>, %arg4: memref<32x32xbf16, #tpu.memory_space<vmem>>, %arg5: memref<1x32xf32, #tpu.memory_space<vmem>>, %arg6: memref<32x16xbf16, #tpu.memory_space<vmem>>, %arg7: memref<1x16xf32, #tpu.memory_space<vmem>>, %arg8: memref<16x2xbf16, #tpu.memory_space<vmem>>, %arg9: memref<1x2xf32, #tpu.memory_space<vmem>>, %arg10: memref<16x2xf32, #tpu.memory_space<vmem>>) attributes {dimension_semantics = [#tpu.dimension_semantics<parallel>], iteration_bounds = array<i64: 1>, scalar_prefetch = 0 : i64, scratch_operands = 0 : i64, tpu.core_type = #tpu.core_type<tc>, window_params = [{transform_indices = @transform_0, window_bounds = array<i64: 16, 32>}, {pipeline_mode = #tpu.pipeline_mode<synchronous>, transform_indices = @transform_1, window_bounds = array<i64: 32, 32>}, {pipeline_mode = #tpu.pipeline_mode<synchronous>, transform_indices = @transform_2, window_bounds = array<i64: 1, 32>}, {pipeline_mode = #tpu.pipeline_mode<synchronous>, transform_indices = @transform_3, window_bounds = array<i64: 32, 32>}, {pipeline_mode = #tpu.pipeline_mode<synchronous>, transform_indices = @transform_4, window_bounds = array<i64: 1, 32>}, {pipeline_mode = #tpu.pipeline_mode<synchronous>, transform_indices = @transform_5, window_bounds = array<i64: 32, 16>}, {pipeline_mode = #tpu.pipeline_mode<synchronous>, transform_indices = @transform_6, window_bounds = array<i64: 1, 16>}, {pipeline_mode = #tpu.pipeline_mode<synchronous>, transform_indices = @transform_7, window_bounds = array<i64: 16, 2>}, {pipeline_mode = #tpu.pipeline_mode<synchronous>, transform_indices = @transform_8, window_bounds = array<i64: 1, 2>}, {transform_indices = @transform_9, window_bounds = array<i64: 16, 2>}]} {
    %c0 = arith.constant 0 : index
    %c0_0 = arith.constant 0 : index
    %0 = vector.load %arg1[%c0, %c0_0] : memref<16x32xf32, #tpu.memory_space<vmem>>, vector<16x32xf32>
    %1 = arith.truncf %0 : vector<16x32xf32> to vector<16x32xbf16>
    %c0_1 = arith.constant 0 : index
    %c0_2 = arith.constant 0 : index
    %2 = vector.load %arg2[%c0_1, %c0_2] : memref<32x32xbf16, #tpu.memory_space<vmem>>, vector<32x32xbf16>
    %cst = arith.constant dense<0.000000e+00> : vector<16x32xf32>
    %3 = tpu.matmul %1, %2, %cst {dimension_numbers = #tpu.dot_dimension_numbers<[1], [0], [0], [1], [0, 0, 1, 1], [], []>} : vector<16x32xbf16>, vector<32x32xbf16>, vector<16x32xf32> -> vector<16x32xf32>
    %c0_3 = arith.constant 0 : index
    %c0_4 = arith.constant 0 : index
    %4 = vector.load %arg3[%c0_3, %c0_4] : memref<1x32xf32, #tpu.memory_space<vmem>>, vector<1x32xf32>
    %5 = vector.broadcast %4 : vector<1x32xf32> to vector<16x32xf32>
    %6 = arith.addf %3, %5 : vector<16x32xf32>
    %cst_5 = arith.constant 0.000000e+00 : f32
    %7 = vector.broadcast %cst_5 : f32 to vector<16x32xf32>
    %8 = arith.maximumf %6, %7 : vector<16x32xf32>
    %9 = arith.truncf %8 : vector<16x32xf32> to vector<16x32xbf16>
    %c0_6 = arith.constant 0 : index
    %c0_7 = arith.constant 0 : index
    %10 = vector.load %arg4[%c0_6, %c0_7] : memref<32x32xbf16, #tpu.memory_space<vmem>>, vector<32x32xbf16>
    %cst_8 = arith.constant dense<0.000000e+00> : vector<16x32xf32>
    %11 = tpu.matmul %9, %10, %cst_8 {dimension_numbers = #tpu.dot_dimension_numbers<[1], [0], [0], [1], [0, 0, 1, 1], [], []>} : vector<16x32xbf16>, vector<32x32xbf16>, vector<16x32xf32> -> vector<16x32xf32>
    %c0_9 = arith.constant 0 : index
    %c0_10 = arith.constant 0 : index
    %12 = vector.load %arg5[%c0_9, %c0_10] : memref<1x32xf32, #tpu.memory_space<vmem>>, vector<1x32xf32>
    %13 = vector.broadcast %12 : vector<1x32xf32> to vector<16x32xf32>
    %14 = arith.addf %11, %13 : vector<16x32xf32>
    %cst_11 = arith.constant 0.000000e+00 : f32
    %15 = vector.broadcast %cst_11 : f32 to vector<16x32xf32>
    %16 = arith.maximumf %14, %15 : vector<16x32xf32>
    %17 = arith.truncf %16 : vector<16x32xf32> to vector<16x32xbf16>
    %c0_12 = arith.constant 0 : index
    %c0_13 = arith.constant 0 : index
    %18 = vector.load %arg6[%c0_12, %c0_13] : memref<32x16xbf16, #tpu.memory_space<vmem>>, vector<32x16xbf16>
    %cst_14 = arith.constant dense<0.000000e+00> : vector<16x16xf32>
    %19 = tpu.matmul %17, %18, %cst_14 {dimension_numbers = #tpu.dot_dimension_numbers<[1], [0], [0], [1], [0, 0, 1, 1], [], []>} : vector<16x32xbf16>, vector<32x16xbf16>, vector<16x16xf32> -> vector<16x16xf32>
    %c0_15 = arith.constant 0 : index
    %c0_16 = arith.constant 0 : index
    %20 = vector.load %arg7[%c0_15, %c0_16] : memref<1x16xf32, #tpu.memory_space<vmem>>, vector<1x16xf32>
    %21 = vector.broadcast %20 : vector<1x16xf32> to vector<16x16xf32>
    %22 = arith.addf %19, %21 : vector<16x16xf32>
    %cst_17 = arith.constant 0.000000e+00 : f32
    %23 = vector.broadcast %cst_17 : f32 to vector<16x16xf32>
    %24 = arith.maximumf %22, %23 : vector<16x16xf32>
    %25 = arith.truncf %24 : vector<16x16xf32> to vector<16x16xbf16>
    %c0_18 = arith.constant 0 : index
    %c0_19 = arith.constant 0 : index
    %26 = vector.load %arg8[%c0_18, %c0_19] : memref<16x2xbf16, #tpu.memory_space<vmem>>, vector<16x2xbf16>
    %cst_20 = arith.constant dense<0.000000e+00> : vector<16x2xf32>
    %27 = tpu.matmul %25, %26, %cst_20 {dimension_numbers = #tpu.dot_dimension_numbers<[1], [0], [0], [1], [0, 0, 1, 1], [], []>} : vector<16x16xbf16>, vector<16x2xbf16>, vector<16x2xf32> -> vector<16x2xf32>
    %c0_21 = arith.constant 0 : index
    %c0_22 = arith.constant 0 : index
    %28 = vector.load %arg9[%c0_21, %c0_22] : memref<1x2xf32, #tpu.memory_space<vmem>>, vector<1x2xf32>
    %29 = vector.broadcast %28 : vector<1x2xf32> to vector<16x2xf32>
    %30 = arith.addf %27, %29 : vector<16x2xf32>
    %cst_23 = arith.constant dense<0xFF800000> : vector<16xf32>
    %31 = vector.multi_reduction <maximumf>, %30, %cst_23 [1] : vector<16x2xf32> to vector<16xf32>
    %32 = vector.shape_cast %31 : vector<16xf32> to vector<16x1xf32>
    %33 = vector.broadcast %32 : vector<16x1xf32> to vector<16x2xf32>
    %34 = arith.subf %30, %33 : vector<16x2xf32>
    %35 = math.exp %34 : vector<16x2xf32>
    %cst_24 = arith.constant dense<0.000000e+00> : vector<16xf32>
    %36 = vector.multi_reduction <add>, %35, %cst_24 [1] : vector<16x2xf32> to vector<16xf32>
    %37 = vector.shape_cast %36 : vector<16xf32> to vector<16x1xf32>
    %38 = tpu.reciprocal %37 {approx = true} : vector<16x1xf32> -> vector<16x1xf32>
    %39 = vector.broadcast %38 : vector<16x1xf32> to vector<16x2xf32>
    %40 = arith.mulf %35, %39 : vector<16x2xf32>
    %c0_25 = arith.constant 0 : index
    %c0_26 = arith.constant 0 : index
    %41 = vector.load %arg10[%c0_25, %c0_26] : memref<16x2xf32, #tpu.memory_space<vmem>>, vector<16x2xf32>
    tpu.vector_store %arg10[%c0_25, %c0_26], %40 {strides = array<i32>} : memref<16x2xf32, #tpu.memory_space<vmem>>, vector<16x2xf32>,
    return
  }
  func.func @transform_0(%arg0: i32) -> (i32, i32) {
    %c0_i32 = arith.constant 0 : i32
    %c0_i32_0 = arith.constant 0 : i32
    return %arg0, %c0_i32 : i32, i32
  }
  func.func @transform_1(%arg0: i32) -> (i32, i32) {
    %c0_i32 = arith.constant 0 : i32
    %c0_i32_0 = arith.constant 0 : i32
    %c0_i32_1 = arith.constant 0 : i32
    return %c0_i32, %c0_i32_0 : i32, i32
  }
  func.func @transform_2(%arg0: i32) -> (i32, i32) {
    %c0_i32 = arith.constant 0 : i32
    %c0_i32_0 = arith.constant 0 : i32
    %c0_i32_1 = arith.constant 0 : i32
    return %c0_i32, %c0_i32_0 : i32, i32
  }
  func.func @transform_3(%arg0: i32) -> (i32, i32) {
    %c0_i32 = arith.constant 0 : i32
    %c0_i32_0 = arith.constant 0 : i32
    %c0_i32_1 = arith.constant 0 : i32
    return %c0_i32, %c0_i32_0 : i32, i32
  }
  func.func @transform_4(%arg0: i32) -> (i32, i32) {
    %c0_i32 = arith.constant 0 : i32
    %c0_i32_0 = arith.constant 0 : i32
    %c0_i32_1 = arith.constant 0 : i32
    return %c0_i32, %c0_i32_0 : i32, i32
  }
  func.func @transform_5(%arg0: i32) -> (i32, i32) {
    %c0_i32 = arith.constant 0 : i32
    %c0_i32_0 = arith.constant 0 : i32
    %c0_i32_1 = arith.constant 0 : i32
    return %c0_i32, %c0_i32_0 : i32, i32
  }
  func.func @transform_6(%arg0: i32) -> (i32, i32) {
    %c0_i32 = arith.constant 0 : i32
    %c0_i32_0 = arith.constant 0 : i32
    %c0_i32_1 = arith.constant 0 : i32
    return %c0_i32, %c0_i32_0 : i32, i32
  }
  func.func @transform_7(%arg0: i32) -> (i32, i32) {
    %c0_i32 = arith.constant 0 : i32
    %c0_i32_0 = arith.constant 0 : i32
    %c0_i32_1 = arith.constant 0 : i32
    return %c0_i32, %c0_i32_0 : i32, i32
  }
  func.func @transform_8(%arg0: i32) -> (i32, i32) {
    %c0_i32 = arith.constant 0 : i32
    %c0_i32_0 = arith.constant 0 : i32
    %c0_i32_1 = arith.constant 0 : i32
    return %c0_i32, %c0_i32_0 : i32, i32
  }
  func.func @transform_9(%arg0: i32) -> (i32, i32) {
    %c0_i32 = arith.constant 0 : i32
    %c0_i32_0 = arith.constant 0 : i32
    return %arg0, %c0_i32 : i32, i32
  }
}

</mosaic_0001>

<llo_original>
// kernel: tpu_custom_call.1
$region0: #{tpu_custom_call.1}
  #allocation0 [shape = 'u32[]', space=smem, size = 0x4, offset = 0x4, fixed_abs, tag = 'smem constant byte address 0x4 - core index']
  #allocation1 [shape = 'u32[144,128]{1,0:T(1,128)}', space=vmem, size = 0x12000, scoped, tag = 'internal scratch']
  %s0 = inlined_call_operand.vmem [shape: f32[16,32], index: 0, kind: input, shape index: {}]
  %s1 = inlined_call_operand.vmem [shape: bf16[32,32], index: 1, kind: input, shape index: {}]
  %s2 = inlined_call_operand.hbm [shape: f32[1,32], index: 2, kind: input, shape index: {}]
  %s3 = inlined_call_operand.hbm [shape: bf16[32,32], index: 3, kind: input, shape index: {}]
  %s4 = inlined_call_operand.vmem [shape: f32[1,32], index: 4, kind: input, shape index: {}]
  %s5 = inlined_call_operand.vmem [shape: bf16[32,16], index: 5, kind: input, shape index: {}]
  %s6 = inlined_call_operand.vmem [shape: f32[1,16], index: 6, kind: input, shape index: {}]
  %s7 = inlined_call_operand.vmem [shape: bf16[16,2], index: 7, kind: input, shape index: {}]
  %s8 = inlined_call_operand.vmem [shape: f32[1,2], index: 8, kind: input, shape index: {}]
  %s9 = inlined_call_operand.vmem [shape: f32[16,2], index: 9, kind: output, shape index: {}]
  %s10 = sld [smem:[#allocation0]]
  $region54: #{tpu_custom_call.1} parent=0
    _
  %s12 = ssub.s32 1, %s10
  %s13 = scalar_select 0, %s12, %s10
  $region1: #{tpu_custom_call.1} parent=0
    #allocation2 [shape = 'u8[512]{0}', space=vmem, size = 0x400, scoped, tag = 'input window, operand 2, single buffered']
    #allocation3 [shape = 's32[1]{0}', space=sflag, size = 0x4, scoped, tag = 'scoped memory for tpu_custom_call.1']
    #allocation4 [shape = 'u8[8192]{0}', space=vmem, size = 0x2000, scoped, tag = 'input window, operand 3, single buffered']
    #allocation5 [shape = 's32[1]{0}', space=sflag, size = 0x4, scoped, tag = 'scoped memory for tpu_custom_call.1']
    %14 = vsyncpa [#allocation3], 0
    %15 = vsyncpa [#allocation5], 0
    // Predicated region
    $region2: #{tpu_custom_call.1} parent=1 // pred_check
      _
    $region3: #{tpu_custom_call.1} parent=1 // pred_check_branch
      %17 = sbr.rel (0) target = $region5
    $region4: #{tpu_custom_call.1} parent=1 // pred_region
      _
    $region5: #{tpu_custom_call.1} parent=1 // pred_fallthru
      _
    // Predicated region
    $region6: #{tpu_custom_call.1} parent=1 // pred_check
      _
    $region7: #{tpu_custom_call.1} parent=1 // pred_check_branch
      %19 = sbr.rel (0) target = $region9
    $region8: #{tpu_custom_call.1} parent=1 // pred_region
      _
    $region9: #{tpu_custom_call.1} parent=1 // pred_fallthru
      _
    // Predicated region
    $region10: #{tpu_custom_call.1} parent=1 // pred_check
      _
    $region11: #{tpu_custom_call.1} parent=1 // pred_check_branch
      %21 = sbr.rel (0) target = $region13
    $region12: #{tpu_custom_call.1} parent=1 // pred_region
      %s23 = ssub.s32 16, 16
      %24 = vsyncadd [#allocation3], %s23
      %s26 = sshll.u32 [#allocation2], 4
      %s27 = int_to_ptr.vmem [resolvable:$true] %s26
      %29 = dma.hbm_to_vmem [thread:$0]  %s2, 16, %s27, [#allocation3]
    $region13: #{tpu_custom_call.1} parent=1 // pred_fallthru
      _
    // Predicated region
    $region14: #{tpu_custom_call.1} parent=1 // pred_check
      _
    $region15: #{tpu_custom_call.1} parent=1 // pred_check_branch
      %31 = sbr.rel (0) target = $region17
    $region16: #{tpu_custom_call.1} parent=1 // pred_region
      %s33 = ssub.s32 256, 256
      %34 = vsyncadd [#allocation5], %s33
      %s35 = sshll.u32 [#allocation4], 4
      %s36 = int_to_ptr.vmem [resolvable:$true] %s35
      %41 = dma.hbm_to_vmem [thread:$0]  %s3, 256, %s36, [#allocation5], 64, 64, 4
    $region17: #{tpu_custom_call.1} parent=1 // pred_fallthru
      _
    // Predicated region
    $region18: #{tpu_custom_call.1} parent=1 // pred_check
      _
    $region19: #{tpu_custom_call.1} parent=1 // pred_check_branch
      %43 = sbr.rel (0) target = $region21
    $region20: #{tpu_custom_call.1} parent=1 // pred_region
      _
    $region21: #{tpu_custom_call.1} parent=1 // pred_fallthru
      _
    // Predicated region
    $region22: #{tpu_custom_call.1} parent=1 // pred_check
      _
    $region23: #{tpu_custom_call.1} parent=1 // pred_check_branch
      %45 = sbr.rel (0) target = $region25
    $region24: #{tpu_custom_call.1} parent=1 // pred_region
      _
    $region25: #{tpu_custom_call.1} parent=1 // pred_fallthru
      _
    // Predicated region
    $region26: #{tpu_custom_call.1} parent=1 // pred_check
      _
    $region27: #{tpu_custom_call.1} parent=1 // pred_check_branch
      %47 = sbr.rel (0) target = $region29
    $region28: #{tpu_custom_call.1} parent=1 // pred_region
      _
    $region29: #{tpu_custom_call.1} parent=1 // pred_fallthru
      _
    // Predicated region
    $region30: #{tpu_custom_call.1} parent=1 // pred_check
      _
    $region31: #{tpu_custom_call.1} parent=1 // pred_check_branch
      %49 = sbr.rel (0) target = $region33
    $region32: #{tpu_custom_call.1} parent=1 // pred_region
      _
    $region33: #{tpu_custom_call.1} parent=1 // pred_fallthru
      _
    // Predicated region
    $region34: #{tpu_custom_call.1} parent=1 // pred_check
      _
    $region35: #{tpu_custom_call.1} parent=1 // pred_check_branch
      %51 = sbr.rel (0) target = $region37
    $region36: #{tpu_custom_call.1} parent=1 // pred_region
      _
    $region37: #{tpu_custom_call.1} parent=1 // pred_fallthru
      _
    // Predicated region
    $region38: #{tpu_custom_call.1} parent=1 // pred_check
      _
    $region39: #{tpu_custom_call.1} parent=1 // pred_check_branch
      %53 = sbr.rel (0) target = $region41
    $region40: #{tpu_custom_call.1} parent=1 // pred_region
      %54 = dma.done [#allocation3], 16
    $region41: #{tpu_custom_call.1} parent=1 // pred_fallthru
      _
    // Predicated region
    $region42: #{tpu_custom_call.1} parent=1 // pred_check
      _
    $region43: #{tpu_custom_call.1} parent=1 // pred_check_branch
      %56 = sbr.rel (0) target = $region45
    $region44: #{tpu_custom_call.1} parent=1 // pred_region
      %57 = dma.done [#allocation5], 256
    $region45: #{tpu_custom_call.1} parent=1 // pred_fallthru
      _
    %v59 = vld [vmem:[%s0] sm:$0xff]
    %v60 = vld [vmem:[%s0 + $0x8] sm:$0xff]
    %v61 = vpack.c.bf16 %v60, %v59
    %v62 = vld [vmem:[%s1] sm:$0xf]
    %v63 = vld [vmem:[%s1 + $0x4] sm:$0xf]
    %v64 = vld [vmem:[%s1 + $0x8] sm:$0xf]
    %v65 = vld [vmem:[%s1 + $0xc] sm:$0xf]
    %v66 = vld [vmem:[#allocation2] sm:$0x1]
    %v68 = vlaneseq
    %v69 = vshrl.u32 %v68, 7
    %v70 = vsub.s32 0, %v69
    %v71 = vrot.slane %v66, %v70
    %v77 = vunpack.c.l.b16 %v62
    %v78 = vunpack.c.l.b16 %v63
    %v79 = vunpack.c.l.b16 %v64
    %v80 = vunpack.c.l.b16 %v65
    %v81 = vpack.c.b16 %v78, %v77
    %v82 = vpack.c.b16 %v80, %v79
    %vm85 = vcmask 261120
    %v87 = vsel %vm85, %v61, 0
    %89 = vmatprep.subr.bf16.mxu0 0
    %90 = vmatpush1.bf16.msra.mxu0 %v81
    %91 = vmatprep.subr.bf16.mxu0 0
    %92 = vmatpush1.bf16.msra.mxu0 %v82
    %93 = vmatprep.subr.bf16.mxu0 0
    %94 = vmatpush1.bf16.msra.mxu0 0
    %95 = vmatprep.subr.bf16.mxu0 0
    %96 = vmatpush1.bf16.msra.mxu0 0
    %97 = vmatprep.subr.bf16.mxu0 0
    %98 = vmatpush1.bf16.msra.mxu0 0
    %99 = vmatprep.subr.bf16.mxu0 0
    %100 = vmatpush1.bf16.msra.mxu0 0
    %101 = vmatprep.subr.bf16.mxu0 0
    %102 = vmatpush1.bf16.msra.mxu0 0
    %103 = vmatprep.subr.bf16.mxu0 0
    %104 = vmatpush1.bf16.msra.mxu0 0
    %105 = vmatprep.subr.bf16.mxu0 0
    %106 = vmatpush1.bf16.msra.mxu0 0
    %107 = vmatprep.subr.bf16.mxu0 0
    %108 = vmatpush1.bf16.msra.mxu0 0
    %109 = vmatprep.subr.bf16.mxu0 0
    %110 = vmatpush1.bf16.msra.mxu0 0
    %111 = vmatprep.subr.bf16.mxu0 0
    %112 = vmatpush1.bf16.msra.mxu0 0
    %113 = vmatprep.subr.bf16.mxu0 0
    %114 = vmatpush1.bf16.msra.mxu0 0
    %115 = vmatprep.subr.bf16.mxu0 0
    %116 = vmatpush1.bf16.msra.mxu0 0
    %117 = vmatprep.subr.bf16.mxu0 0
    %118 = vmatpush1.bf16.msra.mxu0 0
    %119 = vmatprep.subr.bf16.mxu0 0
    %120 = vmatpush1.bf16.msra.mxu0 0
    %121 = vmatprep.mubr.bf16.mxu0 0
    %122 = vmatmul.mubr.bf16.gmra.mrb[0].mxu0 %v87
    %v123 = vpop.f32.mrb[0].mxu0
    %v124 = vadd.f32 %v71, %v123
    %v125 = vpop.f32.mrb[0].mxu0
    %v126 = vpop.f32.mrb[0].mxu0
    %v127 = vadd.f32 %v71, %v126
    %v128 = vpop.f32.mrb[0].mxu0
    %129 = vdwg.mxu0
    %v130 = vmax.f32 %v124, 0.0
    %v131 = vmax.f32 %v127, 0.0
    %v132 = vpack.c.bf16 %v131, %v130
    %v133 = vld [vmem:[#allocation4] sm:$0xf]
    %v134 = vld [vmem:[#allocation4 + $0x4] sm:$0xf]
    %v135 = vld [vmem:[#allocation4 + $0x8] sm:$0xf]
    %v136 = vld [vmem:[#allocation4 + $0xc] sm:$0xf]
    %v137 = vld [vmem:[%s4] sm:$0x1]
    %v139 = vlaneseq
    %v140 = vshrl.u32 %v139, 7
    %v141 = vsub.s32 0, %v140
    %v142 = vrot.slane %v137, %v141
    %v148 = vunpack.c.l.b16 %v133
    %v149 = vunpack.c.l.b16 %v134
    %v150 = vunpack.c.l.b16 %v135
    %v151 = vunpack.c.l.b16 %v136
    %v152 = vpack.c.b16 %v149, %v148
    %v153 = vpack.c.b16 %v151, %v150
    %v157 = vsel %vm85, %v132, 0
    %159 = vmatprep.subr.bf16.mxu0 0
    %160 = vmatpush1.bf16.msra.mxu0 %v152
    %161 = vmatprep.subr.bf16.mxu0 0
    %162 = vmatpush1.bf16.msra.mxu0 %v153
    %163 = vmatprep.subr.bf16.mxu0 0
    %164 = vmatpush1.bf16.msra.mxu0 0
    %165 = vmatprep.subr.bf16.mxu0 0
    %166 = vmatpush1.bf16.msra.mxu0 0
    %167 = vmatprep.subr.bf16.mxu0 0
    %168 = vmatpush1.bf16.msra.mxu0 0
    %169 = vmatprep.subr.bf16.mxu0 0
    %170 = vmatpush1.bf16.msra.mxu0 0
    %171 = vmatprep.subr.bf16.mxu0 0
    %172 = vmatpush1.bf16.msra.mxu0 0
    %173 = vmatprep.subr.bf16.mxu0 0
    %174 = vmatpush1.bf16.msra.mxu0 0
    %175 = vmatprep.subr.bf16.mxu0 0
    %176 = vmatpush1.bf16.msra.mxu0 0
    %177 = vmatprep.subr.bf16.mxu0 0
    %178 = vmatpush1.bf16.msra.mxu0 0
    %179 = vmatprep.subr.bf16.mxu0 0
    %180 = vmatpush1.bf16.msra.mxu0 0
    %181 = vmatprep.subr.bf16.mxu0 0
    %182 = vmatpush1.bf16.msra.mxu0 0
    %183 = vmatprep.subr.bf16.mxu0 0
    %184 = vmatpush1.bf16.msra.mxu0 0
    %185 = vmatprep.subr.bf16.mxu0 0
    %186 = vmatpush1.bf16.msra.mxu0 0
    %187 = vmatprep.subr.bf16.mxu0 0
    %188 = vmatpush1.bf16.msra.mxu0 0
    %189 = vmatprep.subr.bf16.mxu0 0
    %190 = vmatpush1.bf16.msra.mxu0 0
    %191 = vmatprep.mubr.bf16.mxu0 0
    %192 = vmatmul.mubr.bf16.gmra.mrb[0].mxu0 %v157
    %v193 = vpop.f32.mrb[0].mxu0
    %v194 = vadd.f32 %v142, %v193
    %v195 = vpop.f32.mrb[0].mxu0
    %v196 = vpop.f32.mrb[0].mxu0
    %v197 = vadd.f32 %v142, %v196
    %v198 = vpop.f32.mrb[0].mxu0
    %199 = vdwg.mxu0
    %v200 = vmax.f32 %v194, 0.0
    %v201 = vmax.f32 %v197, 0.0
    %v202 = vpack.c.bf16 %v201, %v200
    %v203 = vld [vmem:[%s5] sm:$0xf]
    %v204 = vld [vmem:[%s5 + $0x4] sm:$0xf]
    %v205 = vld [vmem:[%s5 + $0x8] sm:$0xf]
    %v206 = vld [vmem:[%s5 + $0xc] sm:$0xf]
    %v207 = vld [vmem:[%s6] sm:$0x1]
    %v209 = vlaneseq
    %v210 = vshrl.u32 %v209, 7
    %v211 = vsub.s32 0, %v210
    %v212 = vrot.slane %v207, %v211
    %v218 = vunpack.c.l.b16 %v203
    %v219 = vunpack.c.l.b16 %v204
    %v220 = vunpack.c.l.b16 %v205
    %v221 = vunpack.c.l.b16 %v206
    %v222 = vpack.c.b16 %v219, %v218
    %v223 = vpack.c.b16 %v221, %v220
    %v227 = vsel %vm85, %v202, 0
    %229 = vmatprep.subr.bf16.mxu0 0
    %230 = vmatpush1.bf16.msra.mxu0 %v222
    %231 = vmatprep.subr.bf16.mxu0 0
    %232 = vmatpush1.bf16.msra.mxu0 %v223
    %233 = vmatprep.subr.bf16.mxu0 0
    %234 = vmatpush1.bf16.msra.mxu0 0
    %235 = vmatprep.subr.bf16.mxu0 0
    %236 = vmatpush1.bf16.msra.mxu0 0
    %237 = vmatprep.subr.bf16.mxu0 0
    %238 = vmatpush1.bf16.msra.mxu0 0
    %239 = vmatprep.subr.bf16.mxu0 0
    %240 = vmatpush1.bf16.msra.mxu0 0
    %241 = vmatprep.subr.bf16.mxu0 0
    %242 = vmatpush1.bf16.msra.mxu0 0
    %243 = vmatprep.subr.bf16.mxu0 0
    %244 = vmatpush1.bf16.msra.mxu0 0
    %245 = vmatprep.subr.bf16.mxu0 0
    %246 = vmatpush1.bf16.msra.mxu0 0
    %247 = vmatprep.subr.bf16.mxu0 0
    %248 = vmatpush1.bf16.msra.mxu0 0
    %249 = vmatprep.subr.bf16.mxu0 0
    %250 = vmatpush1.bf16.msra.mxu0 0
    %251 = vmatprep.subr.bf16.mxu0 0
    %252 = vmatpush1.bf16.msra.mxu0 0
    %253 = vmatprep.subr.bf16.mxu0 0
    %254 = vmatpush1.bf16.msra.mxu0 0
    %255 = vmatprep.subr.bf16.mxu0 0
    %256 = vmatpush1.bf16.msra.mxu0 0
    %257 = vmatprep.subr.bf16.mxu0 0
    %258 = vmatpush1.bf16.msra.mxu0 0
    %259 = vmatprep.subr.bf16.mxu0 0
    %260 = vmatpush1.bf16.msra.mxu0 0
    %261 = vmatprep.mubr.bf16.mxu0 0
    %262 = vmatmul.mubr.bf16.gmra.mrb[0].mxu0 %v227
    %v263 = vpop.f32.mrb[0].mxu0
    %v264 = vadd.f32 %v212, %v263
    %v265 = vpop.f32.mrb[0].mxu0
    %v266 = vpop.f32.mrb[0].mxu0
    %v267 = vadd.f32 %v212, %v266
    %v268 = vpop.f32.mrb[0].mxu0
    %269 = vdwg.mxu0
    %v270 = vmax.f32 %v264, 0.0
    %v271 = vmax.f32 %v267, 0.0
    %v272 = vpack.c.bf16 %v271, %v270
    %v273 = vld [vmem:[%s7] sm:$0xf]
    %v274 = vld [vmem:[%s7 + $0x4] sm:$0xf]
    %v275 = vld [vmem:[%s8] sm:$0x1]
    %v277 = vlaneseq
    %v278 = vshrl.u32 %v277, 7
    %v279 = vsub.s32 0, %v278
    %v280 = vrot.slane %v275, %v279
    %v284 = vunpack.c.l.b16 %v273
    %v285 = vunpack.c.l.b16 %v274
    %v286 = vpack.c.b16 %v285, %v284
    %vm288 = vcmask 130048
    %v290 = vsel %vm288, %v272, 0
    %292 = vmatprep.subr.bf16.mxu0 0
    %293 = vmatpush1.bf16.msra.mxu0 %v286
    %294 = vmatprep.subr.bf16.mxu0 0
    %295 = vmatpush1.bf16.msra.mxu0 0
    %296 = vmatprep.subr.bf16.mxu0 0
    %297 = vmatpush1.bf16.msra.mxu0 0
    %298 = vmatprep.subr.bf16.mxu0 0
    %299 = vmatpush1.bf16.msra.mxu0 0
    %300 = vmatprep.subr.bf16.mxu0 0
    %301 = vmatpush1.bf16.msra.mxu0 0
    %302 = vmatprep.subr.bf16.mxu0 0
    %303 = vmatpush1.bf16.msra.mxu0 0
    %304 = vmatprep.subr.bf16.mxu0 0
    %305 = vmatpush1.bf16.msra.mxu0 0
    %306 = vmatprep.subr.bf16.mxu0 0
    %307 = vmatpush1.bf16.msra.mxu0 0
    %308 = vmatprep.subr.bf16.mxu0 0
    %309 = vmatpush1.bf16.msra.mxu0 0
    %310 = vmatprep.subr.bf16.mxu0 0
    %311 = vmatpush1.bf16.msra.mxu0 0
    %312 = vmatprep.subr.bf16.mxu0 0
    %313 = vmatpush1.bf16.msra.mxu0 0
    %314 = vmatprep.subr.bf16.mxu0 0
    %315 = vmatpush1.bf16.msra.mxu0 0
    %316 = vmatprep.subr.bf16.mxu0 0
    %317 = vmatpush1.bf16.msra.mxu0 0
    %318 = vmatprep.subr.bf16.mxu0 0
    %319 = vmatpush1.bf16.msra.mxu0 0
    %320 = vmatprep.subr.bf16.mxu0 0
    %321 = vmatpush1.bf16.msra.mxu0 0
    %322 = vmatprep.subr.bf16.mxu0 0
    %323 = vmatpush1.bf16.msra.mxu0 0
    %324 = vmatprep.mubr.bf16.mxu0 0
    %325 = vmatmul.mubr.bf16.gmra.mrb[0].mxu0 %v290
    %v326 = vpop.f32.mrb[0].mxu0
    %v327 = vadd.f32 %v280, %v326
    %v328 = vpop.f32.mrb[0].mxu0
    %v329 = vpop.f32.mrb[0].mxu0
    %v330 = vadd.f32 %v280, %v329
    %v331 = vpop.f32.mrb[0].mxu0
    %332 = vdwg.mxu0
    %vm333 = vcmask 15360
    %v334 = vsel %vm333, %v327, -inf
    %335 = vmax.xlane.f32.xlu0 %v334
    %v336 = vpop.xlane.xlu0 %335
    %v337 = vsel %vm333, %v330, -inf
    %338 = vmax.xlane.f32.xlu0 %v337
    %v339 = vpop.xlane.xlu0 %338
    %v340 = vsub.f32 %v327, %v336
    %v341 = vsub.f32 %v330, %v339
    %v342 = vmul.f32 %v340, 1.442695
    %v343 = vpow.pop %v342
    %v344 = vmul.f32 %v341, 1.442695
    %v345 = vpow.pop %v344
    %v346 = vsel %vm333, %v343, 0.0
    %347 = vadd.xlane.f32.xlu0 %v346
    %v348 = vpop.xlane.xlu0 %347
    %v349 = vsel %vm333, %v345, 0.0
    %350 = vadd.xlane.f32.xlu0 %v349
    %v351 = vpop.xlane.xlu0 %350
    %v352 = vrcp.pop %v348
    %v353 = vrcp.pop %v351
    %v354 = vmul.f32 %v343, %v352
    %v355 = vmul.f32 %v345, %v353
    %356 = vst.msk [vmem:[%s9] sm:$0xff] %vm333, %v354
    %357 = vst.msk [vmem:[%s9 + $0x8] sm:$0xff] %vm333, %v355
    // Predicated region
    $region46: #{tpu_custom_call.1} parent=1 // pred_check
      _
    $region47: #{tpu_custom_call.1} parent=1 // pred_check_branch
      %359 = sbr.rel (0) target = $region49
    $region48: #{tpu_custom_call.1} parent=1 // pred_region
      _
    $region49: #{tpu_custom_call.1} parent=1 // pred_fallthru
      _
    // Predicated region
    $region50: #{tpu_custom_call.1} parent=1 // pred_check
      _
    $region51: #{tpu_custom_call.1} parent=1 // pred_check_branch
      %361 = sbr.rel (0) target = $region53
    $region52: #{tpu_custom_call.1} parent=1 // pred_region
      _
    $region53: #{tpu_custom_call.1} parent=1 // pred_fallthru
      _
    %362 = vsyncpa [#allocation3], 1
    %363 = vsyncpa [#allocation5], 1

</llo_original>
